<compile_context>
chip_gen: v7x
topology: tpu7x:2x2x1
jax: 0.10.0
libtpu: 0.0.40
codegen_flags: <defaults>
</compile_context>

<pallas_src>
import math
import functools

import numpy as np
import jax
import jax.numpy as jnp
from jax.experimental import pallas as pl
from jax.experimental.pallas import tpu as pltpu

NEG_INF = float(np.finfo(np.float32).min)


def _round_up(x, m):
    return ((x + m - 1) // m) * m


def monotonic_energy_kernel(klens_ref, q_ref, k_ref, r_ref, out_ref, *, k_tile):
    # klens_ref : SMEM int32 [B]          (scalar prefetch) per-utterance key lengths
    # q_ref     : (1, 1, q_tile, d_k)     pre-projected, pre-scaled query slice (this head)
    # k_ref     : (1, 1, k_tile, d_k)     pre-projected key slice (this head)
    # r_ref     : SMEM f32 [1]            learnable offset r
    # out_ref   : (1, 1, q_tile, k_tile)  energies
    b = pl.program_id(0)
    ki = pl.program_id(3)

    q = q_ref[0, 0]   # [q_tile, d_k]  (already scaled by 1/sqrt(adim))
    k = k_ref[0, 0]   # [k_tile, d_k]

    # q @ k^T, contracting over d_k (MXU, f32 accumulate).
    e = jax.lax.dot_general(q, k, (((1,), (1,)), ((), ())),
                            preferred_element_type=jnp.float32)   # [q_tile, k_tile]
    e = e + r_ref[0]

    # In-kernel length mask: global key index of each column vs this utterance's
    # key length. Also NEG_INF-fills the lane-padding columns (col >= klen).
    col = ki * k_tile + jax.lax.broadcasted_iota(jnp.int32, e.shape, 1)
    e = jnp.where(col < klens_ref[b], e, NEG_INF)

    out_ref[0, 0] = e


def monotonic_energy(key, query, klens, wk, bk, wq, bq, r, n_heads,
                     q_tile=256, k_tile=512):
    """Pallas implementation of MonotonicEnergy.forward (scaled_dot, cache=False).

    key   : [B, klen, kdim]   float32
    query : [B, qlen, qdim]   float32
    klens : [B] int32 per-utterance key lengths (None -> no masking), i.e. the
            standard length-style mask of the original module.
    wk/wq : [in_dim, adim] (pre-transposed so y = x @ W + b), bk/bq: [adim]
    r     : scalar offset (learnable parameter)
    Returns energies [B, n_heads, qlen, klen] float32.
    """
    B, klen, kdim = key.shape
    _, qlen, qdim = query.shape
    adim = wk.shape[1]
    assert adim % n_heads == 0
    d_k = adim // n_heads
    scale = math.sqrt(adim)

    if klens is None:
        klens = jnp.full((B,), klen, jnp.int32)
    klens_i = klens.astype(jnp.int32)
    r_arr = jnp.asarray(r, jnp.float32).reshape((1,))

    # ---- Hoisted full-width projections (one lane-dense MXU matmul each). ----
    # Fold 1/sqrt(adim) into q so the kernel epilogue skips a per-element divide
    # of the [qlen, klen] energy matrix.
    k_proj = jnp.dot(key, wk, preferred_element_type=jnp.float32) + bk              # [B, klen, adim]
    q_proj = (jnp.dot(query, wq, preferred_element_type=jnp.float32) + bq) / scale  # [B, qlen, adim]

    # Split per head -> [B, H, len, d_k]
    k_h = k_proj.reshape(B, klen, n_heads, d_k).transpose(0, 2, 1, 3)
    q_h = q_proj.reshape(B, qlen, n_heads, d_k).transpose(0, 2, 1, 3)

    # ---- Pad for lane-dense (128-multiple klen) / sublane-aligned (8) tiles. ----
    qlen_p = _round_up(qlen, 8)
    if qlen_p <= q_tile:
        qt = qlen_p
    else:
        qt = q_tile
        qlen_p = _round_up(qlen_p, qt)
    klen_p = _round_up(klen, 128)
    if klen_p <= k_tile:
        kt = klen_p
    else:
        kt = k_tile
        klen_p = _round_up(klen_p, kt)

    if qlen_p != qlen:
        q_h = jnp.pad(q_h, ((0, 0), (0, 0), (0, qlen_p - qlen), (0, 0)))
    if klen_p != klen:
        k_h = jnp.pad(k_h, ((0, 0), (0, 0), (0, klen_p - klen), (0, 0)))

    grid = (B, n_heads, qlen_p // qt, klen_p // kt)

    # Double-buffered per-step VMEM need (out + q + k tiles), with headroom.
    vmem_need = 2 * 4 * (qt * kt + qt * d_k + kt * d_k)
    vmem_limit = int(min(32 << 20, max(16 << 20, 2 * vmem_need)))

    cost = pl.CostEstimate(
        flops=2 * B * n_heads * qlen_p * klen_p * d_k,
        transcendentals=0,
        bytes_accessed=4 * (B * n_heads * (qlen_p * d_k + klen_p * d_k
                                           + qlen_p * klen_p)),
    )

    out_padded = pl.pallas_call(
        functools.partial(monotonic_energy_kernel, k_tile=kt),
        out_shape=jax.ShapeDtypeStruct((B, n_heads, qlen_p, klen_p), jnp.float32),
        grid_spec=pltpu.PrefetchScalarGridSpec(
            num_scalar_prefetch=1,                       # klens -> SMEM
            grid=grid,
            in_specs=[
                # q tile: resident across the innermost k-tile axis (index ignores ki)
                pl.BlockSpec((1, 1, qt, d_k), lambda b, h, qi, ki, klens: (b, h, qi, 0)),
                pl.BlockSpec((1, 1, kt, d_k), lambda b, h, qi, ki, klens: (b, h, ki, 0)),
                # r: tiny scalar, keep it in SMEM (no padded VMEM tile / DMA per step)
                pl.BlockSpec(memory_space=pltpu.MemorySpace.SMEM),
            ],
            out_specs=pl.BlockSpec((1, 1, qt, kt),
                                   lambda b, h, qi, ki, klens: (b, h, qi, ki)),
        ),
        compiler_params=pltpu.CompilerParams(
            dimension_semantics=("parallel", "parallel", "parallel", "arbitrary"),
            vmem_limit_bytes=vmem_limit),
        cost_estimate=cost,
    )(klens_i, q_h, k_h, r_arr)

    return out_padded[:, :, :qlen, :klen]


def monotonic_energy_ref(key, query, mask, wk, bk, wq, bq, r, n_heads):
    """Pure-JAX reference mirroring the PyTorch forward."""
    B, klen, _ = key.shape
    qlen = query.shape[1]
    adim = wk.shape[1]
    d_k = adim // n_heads
    k = (key @ wk + bk).reshape(B, klen, n_heads, d_k).transpose(0, 2, 1, 3)
    q = (query @ wq + bq).reshape(B, qlen, n_heads, d_k).transpose(0, 2, 1, 3)
    e = jnp.einsum('bhqd,bhkd->bhqk', q, k) / math.sqrt(adim) + r
    e = jnp.where((mask == 0)[:, None, :, :], NEG_INF, e)
    return e


if __name__ == "__main__":
    # Small shapes consistent with the module's forward.
    B, klen, qlen = 2, 16, 8
    kdim, qdim, adim, n_heads = 32, 32, 32, 4
    init_r = -4.0

    keys = jax.random.split(jax.random.PRNGKey(0), 6)

    key = jax.random.normal(keys[0], (B, klen, kdim), jnp.float32)
    query = jax.random.normal(keys[1], (B, qlen, qdim), jnp.float32)

    # Length-style mask: key lengths per utterance (second utterance is shorter).
    klens = jnp.array([klen, 12], jnp.int32)
    mask = (jnp.arange(klen)[None, None, :] < klens[:, None, None])
    mask = jnp.broadcast_to(mask, (B, qlen, klen)).astype(jnp.int32)

    # Deterministic xavier-uniform-ish init (gain = 1/sqrt(2)), zero biases,
    # matching reset_parameters(param_init='xavier_uniform', bias=True).
    def xavier(k, fan_in, fan_out, gain):
        lim = gain * math.sqrt(6.0 / (fan_in + fan_out))
        return jax.random.uniform(k, (fan_in, fan_out), jnp.float32, -lim, lim)

    gain = 1.0 / math.sqrt(2.0)
    wk = xavier(keys[2], kdim, adim, gain)   # stored as [in, out] (y = x @ W + b)
    wq = xavier(keys[3], qdim, adim, gain)
    bk = jnp.zeros((adim,), jnp.float32)
    bq = jnp.zeros((adim,), jnp.float32)

    e = monotonic_energy(key, query, klens, wk, bk, wq, bq, init_r, n_heads)
    e = jax.block_until_ready(e)

    e_ref = monotonic_energy_ref(key, query, mask, wk, bk, wq, bq, init_r, n_heads)
    assert e.shape == (B, n_heads, qlen, klen), e.shape
    np.testing.assert_allclose(np.asarray(e), np.asarray(e_ref), rtol=1e-4, atol=1e-4)

    print("KERNEL_OK")
</pallas_src>

<mosaic_0001>
module attributes {stable_mosaic.version = 11 : i64} {
  func.func @monotonic_energy_kernel(%arg0: i32, %arg1: i32, %arg2: i32, %arg3: i32, %arg4: memref<2xi32, #tpu.memory_space<smem>>, %arg5: memref<1x1x8x8xf32, #tpu.memory_space<vmem>>, %arg6: memref<1x1x128x8xf32, #tpu.memory_space<vmem>>, %arg7: memref<1xf32, #tpu.memory_space<smem>>, %arg8: memref<1x1x8x128xf32, #tpu.memory_space<vmem>>) attributes {dimension_semantics = [#tpu.dimension_semantics<parallel>, #tpu.dimension_semantics<parallel>, #tpu.dimension_semantics<parallel>, #tpu.dimension_semantics<arbitrary>], iteration_bounds = array<i64: 2, 4, 1, 1>, scalar_prefetch = 1 : i64, scratch_operands = 0 : i64, tpu.core_type = #tpu.core_type<tc>, window_params = [{transform_indices = @transform_0, window_bounds = array<i64: 1, 1, 8, 8>}, {transform_indices = @transform_1, window_bounds = array<i64: 1, 1, 128, 8>}, {transform_indices = @transform_2, window_bounds = array<i64: 1>}, {transform_indices = @transform_3, window_bounds = array<i64: 1, 1, 8, 128>}]} {
    %c0 = arith.constant 0 : index
    %c0_0 = arith.constant 0 : index
    %c0_1 = arith.constant 0 : index
    %c0_2 = arith.constant 0 : index
    %0 = vector.load %arg5[%c0, %c0_0, %c0_1, %c0_2] : memref<1x1x8x8xf32, #tpu.memory_space<vmem>>, vector<1x1x8x8xf32>
    %1 = vector.shape_cast %0 : vector<1x1x8x8xf32> to vector<8x8xf32>
    %c0_3 = arith.constant 0 : index
    %c0_4 = arith.constant 0 : index
    %c0_5 = arith.constant 0 : index
    %c0_6 = arith.constant 0 : index
    %2 = vector.load %arg6[%c0_3, %c0_4, %c0_5, %c0_6] : memref<1x1x128x8xf32, #tpu.memory_space<vmem>>, vector<1x1x128x8xf32>
    %3 = vector.shape_cast %2 : vector<1x1x128x8xf32> to vector<128x8xf32>
    %cst = arith.constant dense<0.000000e+00> : vector<8x128xf32>
    %4 = tpu.matmul %1, %3, %cst {dimension_numbers = #tpu.dot_dimension_numbers<[1], [1], [0], [0], [0, 0, 1, 0], [], []>} : vector<8x8xf32>, vector<128x8xf32>, vector<8x128xf32> -> vector<8x128xf32>
    %c0_7 = arith.constant 0 : index
    %5 = memref.load %arg7[%c0_7] : memref<1xf32, #tpu.memory_space<smem>>
    %6 = vector.broadcast %5 : f32 to vector<8x128xf32>
    %7 = arith.addf %4, %6 : vector<8x128xf32>
    %c128_i32 = arith.constant 128 : i32
    %8 = arith.muli %arg3, %c128_i32 : i32
    %9 = tpu.iota {dimensions = array<i32: 1>} : vector<8x128xi32>
    %10 = vector.broadcast %8 : i32 to vector<8x128xi32>
    %11 = arith.addi %10, %9 : vector<8x128xi32>
    %12 = arith.index_cast %arg0 : i32 to index
    %13 = memref.load %arg4[%12] : memref<2xi32, #tpu.memory_space<smem>>
    %14 = vector.broadcast %13 : i32 to vector<8x128xi32>
    %15 = arith.cmpi slt, %11, %14 : vector<8x128xi32>
    %cst_8 = arith.constant -3.40282347E+38 : f32
    %16 = vector.broadcast %cst_8 : f32 to vector<8x128xf32>
    %17 = arith.select %15, %7, %16 : vector<8x128xi1>, vector<8x128xf32>
    %c0_9 = arith.constant 0 : index
    %c0_10 = arith.constant 0 : index
    %c0_11 = arith.constant 0 : index
    %c0_12 = arith.constant 0 : index
    %18 = vector.load %arg8[%c0_9, %c0_10, %c0_11, %c0_12] : memref<1x1x8x128xf32, #tpu.memory_space<vmem>>, vector<1x1x8x128xf32>
    %19 = vector.shape_cast %18 : vector<1x1x8x128xf32> to vector<8x128xf32>
    %20 = vector.shape_cast %17 : vector<8x128xf32> to vector<1x1x8x128xf32>
    tpu.vector_store %arg8[%c0_9, %c0_10, %c0_11, %c0_12], %20 {strides = array<i32>} : memref<1x1x8x128xf32, #tpu.memory_space<vmem>>, vector<1x1x8x128xf32>,
    return
  }
  func.func @transform_0(%arg0: i32, %arg1: i32, %arg2: i32, %arg3: i32, %arg4: memref<2xi32, #tpu.memory_space<smem>>) -> (i32, i32, i32, i32) {
    %c0_i32 = arith.constant 0 : i32
    %c0_i32_0 = arith.constant 0 : i32
    return %arg0, %arg1, %arg2, %c0_i32 : i32, i32, i32, i32
  }
  func.func @transform_1(%arg0: i32, %arg1: i32, %arg2: i32, %arg3: i32, %arg4: memref<2xi32, #tpu.memory_space<smem>>) -> (i32, i32, i32, i32) {
    %c0_i32 = arith.constant 0 : i32
    %c0_i32_0 = arith.constant 0 : i32
    return %arg0, %arg1, %arg3, %c0_i32 : i32, i32, i32, i32
  }
  func.func @transform_2(%arg0: i32, %arg1: i32, %arg2: i32, %arg3: i32, %arg4: memref<2xi32, #tpu.memory_space<smem>>) -> i32 {
    %c0_i32 = arith.constant 0 : i32
    %c0_i32_0 = arith.constant 0 : i32
    return %c0_i32 : i32
  }
  func.func @transform_3(%arg0: i32, %arg1: i32, %arg2: i32, %arg3: i32, %arg4: memref<2xi32, #tpu.memory_space<smem>>) -> (i32, i32, i32, i32) {
    %c0_i32 = arith.constant 0 : i32
    return %arg0, %arg1, %arg2, %arg3 : i32, i32, i32, i32
  }
}

</mosaic_0001>

<llo_original>
// kernel: tpu_custom_call.1
$region0: #{tpu_custom_call.1}
  #allocation0 [shape = 'u32[]', space=smem, size = 0x4, offset = 0x4, fixed_abs, tag = 'smem constant byte address 0x4 - core index']
  #allocation1 [shape = 'u32[144,128]{1,0:T(1,128)}', space=vmem, size = 0x12000, scoped, tag = 'internal scratch']
  #allocation2 [shape = 's32[1]{0}', space=sflag, size = 0x4, scoped, tag = 'scoped memory for tpu_custom_call.1']
  #allocation3 [shape = 'u8[512]{0}', space=smem, size = 0x200, scoped, tag = 'prefetched SMEM operand 0']
  #allocation4 [shape = 'f32[1]{0:T(128)S(6)}', space=smem, size = 0x200, scoped, tag = 'scoped memory for tpu_custom_call.1']
  %s0 = inlined_call_operand.vmem [shape: s32[2], index: 0, kind: input, shape index: {}]
  %s1 = inlined_call_operand.vmem [shape: f32[2,4,8,8], index: 1, kind: input, shape index: {}]
  %s2 = inlined_call_operand.vmem [shape: f32[2,4,128,8], index: 2, kind: input, shape index: {}]
  %s3 = inlined_call_operand.<no memory space> [shape: f32[1], index: 3, kind: input, shape index: {}]
  %s4 = inlined_call_operand.hbm [shape: f32[2,4,8,128], index: 4, kind: output, shape index: {}]
  %s5 = sld [smem:[#allocation0]]
  $region45: #{tpu_custom_call.1} parent=0
    _
  %s7 = ssub.s32 1, %s5
  %s8 = scalar_select 0, %s7, %s5
  %s9 = sshll.u32 %s0, 4
  %s10 = int_to_ptr.vmem [resolvable:$true] %s9
  %12 = dma.vmem_to_smem %s10, 16, [#allocation3], [#allocation2]
  %13 = sst [smem:[#allocation4]] %s3
  %14 = dma.done [#allocation2], 16
  %15 = sfence
  $region1: #{tpu_custom_call.1} parent=0
    #allocation5 [shape = 'u8[8192]{0}', space=vmem, size = 0x2000, scoped, tag = 'output window, operand 0']
    #allocation6 [shape = 's32[2]{0}', space=sflag, size = 0x8, scoped, tag = 'scoped memory for tpu_custom_call.1']
    %16 = vsyncpa [#allocation6], 0
    %s17 = scalar_lea.sflag [#allocation6], 1
    %18 = vsyncpa %s17, 0
    loop: start=0, step=1, limit=10
    $region2: #{tpu_custom_call.1} parent=1 // loop_pre_header
      _
    $region3: #{tpu_custom_call.1} parent=1 // loop_header
      %s20 = sphi 0, %s24
      %p21 = scmp.ge.s32.totalorder %s20, 10
      %s27 = sphi 0, %s53
      %s28 = sphi 0, %s49
      %s29 = sphi 0, %s45
      %s30 = sphi 0, %s41
      %s31 = sphi 0, %s27
      %s32 = sphi 0, %s28
      %s33 = sphi 0, %s29
      %s34 = sphi 0, %s30
      %s35 = sphi 0, %s31
      %s36 = sphi 0, %s32
      %s37 = sphi 0, %s33
      %s38 = sphi 0, %s34
      %s60 = sphi 0, %s62
      %s63 = sphi 0, %s60
      %s64 = sphi 0, %s63
      %s80 = sphi 0, %s64
      %s90 = sphi 0, %s92
      %s93 = sphi 0, %s90
      %s94 = sphi 0, %s93
      %s110 = sphi 0, %s94
      %s114 = sphi 0, %s114
      %s116 = sphi 0, %s114
      %s117 = sphi 0, %s116
      %s131 = sphi 0, %s117
      %s143 = sphi 0, %s145
      %s146 = sphi 0, %s143
      %s147 = sphi 0, %s146
      %s163 = sphi 0, %s147
    $region4: #{tpu_custom_call.1} parent=1 // loop_header_branch
      %23 = sbr.rel (%p21) target = $region8
    $region5: #{tpu_custom_call.1} parent=1 // loop_body
      %s25 = ssub.s32 %s20, 1
      %s26 = ssub.s32 %s20, 2
      %s39 = sadd.s32 1, %s30
      %p40 = scmp.ge.s32.totalorder %s39, 1
      %s41 = scalar_select %p40, 0, %s39
      %s42 = sadd.s32 1, %s29
      %s43 = scalar_select %p40, %s42, %s29
      %p44 = scmp.ge.s32.totalorder %s43, 1
      %s45 = scalar_select %p44, 0, %s43
      %s46 = sadd.s32 1, %s28
      %s47 = scalar_select %p44, %s46, %s28
      %p48 = scmp.ge.s32.totalorder %s47, 4
      %s49 = scalar_select %p48, 0, %s47
      %s50 = sadd.s32 1, %s27
      %s51 = scalar_select %p48, %s50, %s27
      %p52 = scmp.ge.s32.totalorder %s51, 2
      %s53 = scalar_select %p52, 0, %s51
      %s54 = ssub.s32 %s27, %s53
      %s55 = ssub.s32 %s28, %s49
      %s56 = sor.u32 %s54, %s55
      %s57 = ssub.s32 %s29, %s45
      %s58 = sor.u32 %s56, %s57
      %p59 = scmp.eq.s32.totalorder %s58, 0
      %s61 = sadd.s32 %s60, 1
      %s62 = scalar_select %p59, %s60, %s61
      %p65 = pneg %p59
      %p66 = scmp.eq.s32.totalorder %s20, 7
      %p67 = por %p65, %p66
      %p68 = scmp.ne.s32.totalorder %s60, %s63
      %p69 = scmp.eq.s32.totalorder %s20, 0
      %p70 = por %p68, %p69
      %p71 = scmp.ne.s32.totalorder %s60, %s63
      %p72 = scmp.eq.s32.totalorder %s25, 7
      %p73 = por %p71, %p72
      %p74 = scmp.ne.s32.totalorder %s63, %s64
      %p75 = scmp.eq.s32.totalorder %s25, 0
      %p76 = por %p74, %p75
      %p77 = scmp.ne.s32.totalorder %s63, %s64
      %p78 = scmp.eq.s32.totalorder %s26, 7
      %p79 = por %p77, %p78
      %p81 = scmp.ne.s32.totalorder %s64, %s80
      %p82 = scmp.eq.s32.totalorder %s26, 0
      %p83 = por %p81, %p82
      %s84 = ssub.s32 %s27, %s53
      %s85 = ssub.s32 %s28, %s49
      %s86 = sor.u32 %s84, %s85
      %s87 = ssub.s32 %s30, %s41
      %s88 = sor.u32 %s86, %s87
      %p89 = scmp.eq.s32.totalorder %s88, 0
      %s91 = sadd.s32 %s90, 1
      %s92 = scalar_select %p89, %s90, %s91
      %p95 = pneg %p89
      %p96 = scmp.eq.s32.totalorder %s20, 7
      %p97 = por %p95, %p96
      %p98 = scmp.ne.s32.totalorder %s90, %s93
      %p99 = scmp.eq.s32.totalorder %s20, 0
      %p100 = por %p98, %p99
      %p101 = scmp.ne.s32.totalorder %s90, %s93
      %p102 = scmp.eq.s32.totalorder %s25, 7
      %p103 = por %p101, %p102
      %p104 = scmp.ne.s32.totalorder %s93, %s94
      %p105 = scmp.eq.s32.totalorder %s25, 0
      %p106 = por %p104, %p105
      %p107 = scmp.ne.s32.totalorder %s93, %s94
      %p108 = scmp.eq.s32.totalorder %s26, 7
      %p109 = por %p107, %p108
      %p111 = scmp.ne.s32.totalorder %s94, %s110
      %p112 = scmp.eq.s32.totalorder %s26, 0
      %p113 = por %p111, %p112
      %s115 = sadd.s32 %s114, 1
      %p118 = scmp.eq.s32.totalorder %s20, 7
      %p119 = scmp.ne.s32.totalorder %s114, %s116
      %p120 = scmp.eq.s32.totalorder %s20, 0
      %p121 = por %p119, %p120
      %p122 = scmp.ne.s32.totalorder %s114, %s116
      %p123 = scmp.eq.s32.totalorder %s25, 7
      %p124 = por %p122, %p123
      %p125 = scmp.ne.s32.totalorder %s116, %s117
      %p126 = scmp.eq.s32.totalorder %s25, 0
      %p127 = por %p125, %p126
      %p128 = scmp.ne.s32.totalorder %s116, %s117
      %p129 = scmp.eq.s32.totalorder %s26, 7
      %p130 = por %p128, %p129
      %p132 = scmp.ne.s32.totalorder %s117, %s131
      %p133 = scmp.eq.s32.totalorder %s26, 0
      %p134 = por %p132, %p133
      %s135 = ssub.s32 %s27, %s53
      %s136 = ssub.s32 %s28, %s49
      %s137 = sor.u32 %s135, %s136
      %s138 = ssub.s32 %s29, %s45
      %s139 = sor.u32 %s137, %s138
      %s140 = ssub.s32 %s30, %s41
      %s141 = sor.u32 %s139, %s140
      %p142 = scmp.eq.s32.totalorder %s141, 0
      %s144 = sadd.s32 %s143, 1
      %s145 = scalar_select %p142, %s143, %s144
      %p148 = pneg %p142
      %p149 = scmp.eq.s32.totalorder %s20, 7
      %p150 = por %p148, %p149
      %p151 = scmp.ne.s32.totalorder %s143, %s146
      %p152 = scmp.eq.s32.totalorder %s20, 0
      %p153 = por %p151, %p152
      %p154 = scmp.ne.s32.totalorder %s143, %s146
      %p155 = scmp.eq.s32.totalorder %s25, 7
      %p156 = por %p154, %p155
      %p157 = scmp.ne.s32.totalorder %s146, %s147
      %p158 = scmp.eq.s32.totalorder %s25, 0
      %p159 = por %p157, %p158
      %p160 = scmp.ne.s32.totalorder %s146, %s147
      %p161 = scmp.eq.s32.totalorder %s26, 7
      %p162 = por %p160, %p161
      %p164 = scmp.ne.s32.totalorder %s147, %s163
      %p165 = scmp.eq.s32.totalorder %s26, 0
      %p166 = por %p164, %p165
      %p167 = scmp.le.s32.totalorder 1, %s20
      %p168 = scmp.lt.s32.totalorder %s20, 9
      %p169 = pnand %p167, %p168
      %p170 = pneg %p169
      // Predicated region
      $region9: #{tpu_custom_call.1} parent=5 // pred_check
        _
      $region10: #{tpu_custom_call.1} parent=5 // pred_check_branch
        %172 = sbr.rel (%p169) target = $region12
      $region11: #{tpu_custom_call.1} parent=5 // pred_region
        %s173 = ssub.s32 %s20, 1
        // Predicated region
        $region13: #{tpu_custom_call.1} parent=11 // pred_check
          %p174 = pneg %p127
        $region14: #{tpu_custom_call.1} parent=11 // pred_check_branch
          %176 = sbr.rel (%p174) target = $region16
        $region15: #{tpu_custom_call.1} parent=11 // pred_region
          _
        $region16: #{tpu_custom_call.1} parent=11 // pred_fallthru
          _
      $region12: #{tpu_custom_call.1} parent=5 // pred_fallthru
        _
      %p177 = scmp.lt.s32.totalorder %s20, 8
      // Predicated region
      $region17: #{tpu_custom_call.1} parent=5 // pred_check
        %p178 = pneg %p177
      $region18: #{tpu_custom_call.1} parent=5 // pred_check_branch
        %180 = sbr.rel (%p178) target = $region20
      $region19: #{tpu_custom_call.1} parent=5 // pred_region
        // Predicated region
        $region21: #{tpu_custom_call.1} parent=19 // pred_check
          %p181 = pneg %p70
        $region22: #{tpu_custom_call.1} parent=19 // pred_check_branch
          %183 = sbr.rel (%p181) target = $region24
        $region23: #{tpu_custom_call.1} parent=19 // pred_region
          %p184 = scmp.lt.s32.totalorder %s27, 1
          %s185 = scalar_select %p184, %s27, 1
          %p186 = scmp.lt.s32.totalorder %s28, 3
          %s187 = scalar_select %p186, %s28, 3
          %p188 = scmp.lt.s32.totalorder %s29, 0
          %s189 = scalar_select %p188, %s29, 0
          %s190 = sadd.s32 %s189, %s187
          %s191 = smul.addr %s185, 4
          %s192 = sadd.s32 %s190, %s191
          %s193 = smul.addr %s192, 8
          %s194 = scalar_lea.vmem %s1, %s193
        $region24: #{tpu_custom_call.1} parent=19 // pred_fallthru
          _
        // Predicated region
        $region25: #{tpu_custom_call.1} parent=19 // pred_check
          %p195 = pneg %p100
        $region26: #{tpu_custom_call.1} parent=19 // pred_check_branch
          %197 = sbr.rel (%p195) target = $region28
        $region27: #{tpu_custom_call.1} parent=19 // pred_region
          %s198 = smul.u32 16, %s30
          %p199 = scmp.lt.s32.totalorder %s27, 1
          %s200 = scalar_select %p199, %s27, 1
          %p201 = scmp.lt.s32.totalorder %s28, 3
          %s202 = scalar_select %p201, %s28, 3
          %p203 = scmp.lt.s32.totalorder %s198, 15
          %s204 = scalar_select %p203, %s198, 15
          %s205 = smul.addr %s202, 16
          %s206 = sadd.s32 %s204, %s205
          %s207 = smul.addr %s200, 64
          %s208 = sadd.s32 %s206, %s207
          %s209 = smul.addr %s208, 8
          %s210 = scalar_lea.vmem %s2, %s209
          %s211 = smul.u32 16, %s30
        $region28: #{tpu_custom_call.1} parent=19 // pred_fallthru
          _
      $region20: #{tpu_custom_call.1} parent=5 // pred_fallthru
        _
      %p212 = scmp.le.s32.totalorder 1, %s20
      %p213 = scmp.lt.s32.totalorder %s20, 9
      %p214 = pnand %p212, %p213
      %p215 = pneg %p214
      // Predicated region
      $region29: #{tpu_custom_call.1} parent=5 // pred_check
        _
      $region30: #{tpu_custom_call.1} parent=5 // pred_check_branch
        %217 = sbr.rel (%p214) target = $region32
      $region31: #{tpu_custom_call.1} parent=5 // pred_region
        %s218 = ssub.s32 %s20, 1
        %p219 = scmp.lt.s32.totalorder %s31, 1
        %s220 = scalar_select %p219, %s31, 1
        %p221 = scmp.lt.s32.totalorder %s32, 3
        %s222 = scalar_select %p221, %s32, 3
        %p223 = scmp.lt.s32.totalorder %s33, 0
        %s224 = scalar_select %p223, %s33, 0
        %s225 = sadd.s32 %s224, %s222
        %s226 = smul.addr %s220, 4
        %s227 = sadd.s32 %s225, %s226
        %s228 = smul.addr %s227, 8
        %s229 = scalar_lea.vmem %s1, %s228
        %p230 = pneg %p76
        %p231 = pneg %p73
        %s232 = smul.u32 16, %s34
        %p233 = scmp.lt.s32.totalorder %s31, 1
        %s234 = scalar_select %p233, %s31, 1
        %p235 = scmp.lt.s32.totalorder %s32, 3
        %s236 = scalar_select %p235, %s32, 3
        %p237 = scmp.lt.s32.totalorder %s232, 15
        %s238 = scalar_select %p237, %s232, 15
        %s239 = smul.addr %s236, 16
        %s240 = sadd.s32 %s238, %s239
        %s241 = smul.addr %s234, 64
        %s242 = sadd.s32 %s240, %s241
        %s243 = smul.addr %s242, 8
        %s244 = scalar_lea.vmem %s2, %s243
        %p245 = pneg %p106
        %p246 = pneg %p103
        %p247 = pneg %p127
        %p248 = pneg %p124
        %p249 = pneg %p159
        %p250 = pneg %p156
        %s251 = sand.u32 %s146, 1
        %s252 = scalar_lea.sflag [#allocation6], %s251
        %s253 = sand.u32 %s146, 1
        %s254 = smul.addr %s253, 8
        %s255 = scalar_lea.vmem [#allocation5], %s254
        %p256 = scmp.lt.s32.totalorder %s31, 1
        %s257 = scalar_select %p256, %s31, 1
        %p258 = scmp.lt.s32.totalorder %s32, 3
        %s259 = scalar_select %p258, %s32, 3
        %p260 = scmp.lt.s32.totalorder %s33, 0
        %s261 = scalar_select %p260, %s33, 0
        %s262 = sadd.s32 %s261, %s259
        %s263 = smul.addr %s257, 4
        %s264 = sadd.s32 %s262, %s263
        %s265 = smul.addr %s264, 8
        %s266 = scalar_lea.vmem %s1, %s265
        %s267 = smul.u32 16, %s34
        %p268 = scmp.lt.s32.totalorder %s31, 1
        %s269 = scalar_select %p268, %s31, 1
        %p270 = scmp.lt.s32.totalorder %s32, 3
        %s271 = scalar_select %p270, %s32, 3
        %p272 = scmp.lt.s32.totalorder %s267, 15
        %s273 = scalar_select %p272, %s267, 15
        %s274 = smul.addr %s271, 16
        %s275 = sadd.s32 %s273, %s274
        %s276 = smul.addr %s269, 64
        %s277 = sadd.s32 %s275, %s276
        %s278 = smul.addr %s277, 8
        %s279 = scalar_lea.vmem %s2, %s278
        %s280 = smul.u32 16, %s34
        %v281 = vld [vmem:[%s266] sm:$0xff]
        %v282 = vld [vmem:[%s279] sm:$0xff]
        %v283 = vld [vmem:[%s279 + $0x8] sm:$0xff]
        %v284 = vld [vmem:[%s279 + $0x10] sm:$0xff]
        %v285 = vld [vmem:[%s279 + $0x18] sm:$0xff]
        %v286 = vld [vmem:[%s279 + $0x20] sm:$0xff]
        %v287 = vld [vmem:[%s279 + $0x28] sm:$0xff]
        %v288 = vld [vmem:[%s279 + $0x30] sm:$0xff]
        %v289 = vld [vmem:[%s279 + $0x38] sm:$0xff]
        %v290 = vld [vmem:[%s279 + $0x40] sm:$0xff]
        %v291 = vld [vmem:[%s279 + $0x48] sm:$0xff]
        %v292 = vld [vmem:[%s279 + $0x50] sm:$0xff]
        %v293 = vld [vmem:[%s279 + $0x58] sm:$0xff]
        %v294 = vld [vmem:[%s279 + $0x60] sm:$0xff]
        %v295 = vld [vmem:[%s279 + $0x68] sm:$0xff]
        %v296 = vld [vmem:[%s279 + $0x70] sm:$0xff]
        %v297 = vld [vmem:[%s279 + $0x78] sm:$0xff]
        %s298 = sld [smem:[#allocation4]]
        %v299 = vstv %s298
        %vm300 = vcmask 64512
        %v302 = vsel %vm300, %v281, 0
        %v305 = vsel %vm300, %v282, 0
        %v308 = vsel %vm300, %v283, 0
        %v311 = vsel %vm300, %v284, 0
        %v314 = vsel %vm300, %v285, 0
        %v317 = vsel %vm300, %v286, 0
        %v320 = vsel %vm300, %v287, 0
        %v323 = vsel %vm300, %v288, 0
        %v326 = vsel %vm300, %v289, 0
        %v329 = vsel %vm300, %v290, 0
        %v332 = vsel %vm300, %v291, 0
        %v335 = vsel %vm300, %v292, 0
        %v338 = vsel %vm300, %v293, 0
        %v341 = vsel %vm300, %v294, 0
        %v344 = vsel %vm300, %v295, 0
        %v347 = vsel %vm300, %v296, 0
        %v350 = vsel %vm300, %v297, 0
        %352 = vmatprep.subr.mxu0 0.0
        %353 = vmatpush1.xpose.msra.mxu0 %v305
        %354 = vmatprep.subr.mxu0 0.0
        %355 = vmatpush1.xpose.msra.mxu0 %v308
        %356 = vmatprep.subr.mxu0 0.0
        %357 = vmatpush1.xpose.msra.mxu0 %v311
        %358 = vmatprep.subr.mxu0 0.0
        %359 = vmatpush1.xpose.msra.mxu0 %v314
        %360 = vmatprep.subr.mxu0 0.0
        %361 = vmatpush1.xpose.msra.mxu0 %v317
        %362 = vmatprep.subr.mxu0 0.0
        %363 = vmatpush1.xpose.msra.mxu0 %v320
        %364 = vmatprep.subr.mxu0 0.0
        %365 = vmatpush1.xpose.msra.mxu0 %v323
        %366 = vmatprep.subr.mxu0 0.0
        %367 = vmatpush1.xpose.msra.mxu0 %v326
        %368 = vmatprep.subr.mxu0 0.0
        %369 = vmatpush1.xpose.msra.mxu0 %v329
        %370 = vmatprep.subr.mxu0 0.0
        %371 = vmatpush1.xpose.msra.mxu0 %v332
        %372 = vmatprep.subr.mxu0 0.0
        %373 = vmatpush1.xpose.msra.mxu0 %v335
        %374 = vmatprep.subr.mxu0 0.0
        %375 = vmatpush1.xpose.msra.mxu0 %v338
        %376 = vmatprep.subr.mxu0 0.0
        %377 = vmatpush1.xpose.msra.mxu0 %v341
        %378 = vmatprep.subr.mxu0 0.0
        %379 = vmatpush1.xpose.msra.mxu0 %v344
        %380 = vmatprep.subr.mxu0 0.0
        %381 = vmatpush1.xpose.msra.mxu0 %v347
        %382 = vmatprep.subr.mxu0 0.0
        %383 = vmatpush1.xpose.msra.mxu0 %v350
        %384 = vmatprep.subr.mxu0 0.0
        %385 = vmatpush1.xpose.msra.mxu0 0.0
        %386 = vmatprep.subr.mxu0 0.0
        %387 = vmatpush1.xpose.msra.mxu0 0.0
        %388 = vmatprep.subr.mxu0 0.0
        %389 = vmatpush1.xpose.msra.mxu0 0.0
        %390 = vmatprep.subr.mxu0 0.0
        %391 = vmatpush1.xpose.msra.mxu0 0.0
        %392 = vmatprep.subr.mxu0 0.0
        %393 = vmatpush1.xpose.msra.mxu0 0.0
        %394 = vmatprep.subr.mxu0 0.0
        %395 = vmatpush1.xpose.msra.mxu0 0.0
        %396 = vmatprep.subr.mxu0 0.0
        %397 = vmatpush1.xpose.msra.mxu0 0.0
        %398 = vmatprep.subr.mxu0 0.0
        %399 = vmatpush1.xpose.msra.mxu0 0.0
        %400 = vmatprep.subr.mxu0 0.0
        %401 = vmatpush1.xpose.msra.mxu0 0.0
        %402 = vmatprep.subr.mxu0 0.0
        %403 = vmatpush1.xpose.msra.mxu0 0.0
        %404 = vmatprep.subr.mxu0 0.0
        %405 = vmatpush1.xpose.msra.mxu0 0.0
        %406 = vmatprep.subr.mxu0 0.0
        %407 = vmatpush1.xpose.msra.mxu0 0.0
        %408 = vmatprep.subr.mxu0 0.0
        %409 = vmatpush1.xpose.msra.mxu0 0.0
        %410 = vmatprep.subr.mxu0 0.0
        %411 = vmatpush1.xpose.msra.mxu0 0.0
        %412 = vmatprep.subr.mxu0 0.0
        %413 = vmatpush1.xpose.msra.mxu0 0.0
        %414 = vmatprep.subr.mxu0 0.0
        %415 = vmatpush1.xpose.msra.mxu0 0.0
        %416 = vmatprep.mubr.f32.mxu0 0.0
        %417 = vmatmul.mubr.f32.gmra.mrb[0].mxu0 %v302
        %v418 = vpop.f32.mrb[0].mxu0
        %v419 = vadd.f32 %v299, %v418
        %v420 = vpop.f32.mrb[0].mxu0
        %421 = vdwg.mxu0
        %s422 = smul.u32 %s34, 128
        %v423 = vlaneseq
        %v424 = vand.u32 %v423, 127
        %v425 = vstv %s422
        %v426 = vadd.s32 %v425, %v424
        %s427 = sld [smem:[#allocation3 + %s31]]
        %v428 = vstv %s427
        %vm429 = vcmp.lt.s32.totalorder %v426, %v428
        %v430 = vsel %vm429, %v419, -3.4028235e+38
        %431 = vst [vmem:[%s255] sm:$0xff] %v430
        %s432 = sand.u32 %s146, 1
        %s433 = scalar_lea.sflag [#allocation6], %s432
        %s434 = sand.u32 %s146, 1
        %s435 = smul.addr %s434, 8
        %s436 = scalar_lea.vmem [#allocation5], %s435
        // Predicated region
        $region33: #{tpu_custom_call.1} parent=31 // pred_check
          %p437 = pneg %p156
        $region34: #{tpu_custom_call.1} parent=31 // pred_check_branch
          %439 = sbr.rel (%p437) target = $region36
        $region35: #{tpu_custom_call.1} parent=31 // pred_region
          %s441 = ssub.s32 128, 128
          %442 = vsyncadd %s433, %s441
          %s443 = sadd.s32 %s34, %s33
          %s444 = sadd.s32 %s443, %s32
          %s445 = smul.addr %s31, 4
          %s446 = sadd.s32 %s444, %s445
          %s447 = smul.addr %s446, 128
          %s448 = scalar_lea.hbm %s4, %s447
          %s450 = sshll.u32 %s436, 4
          %s451 = int_to_ptr.vmem [resolvable:$true] %s450
          %453 = dma.vmem_to_hbm [thread:$0]  %s451, 128, %s448, %s433
        $region36: #{tpu_custom_call.1} parent=31 // pred_fallthru
          _
      $region32: #{tpu_custom_call.1} parent=5 // pred_fallthru
        _
      %p454 = scmp.le.s32.totalorder 2, %s20
      // Predicated region
      $region37: #{tpu_custom_call.1} parent=5 // pred_check
        %p455 = pneg %p454
      $region38: #{tpu_custom_call.1} parent=5 // pred_check_branch
        %457 = sbr.rel (%p455) target = $region40
      $region39: #{tpu_custom_call.1} parent=5 // pred_region
        %s458 = ssub.s32 %s20, 2
        // Predicated region
        $region41: #{tpu_custom_call.1} parent=39 // pred_check
          %p459 = pneg %p162
        $region42: #{tpu_custom_call.1} parent=39 // pred_check_branch
          %461 = sbr.rel (%p459) target = $region44
        $region43: #{tpu_custom_call.1} parent=39 // pred_region
          %s462 = sand.u32 %s147, 1
          %s463 = scalar_lea.sflag [#allocation6], %s462
          %s464 = sand.u32 %s147, 1
          %s465 = smul.addr %s464, 8
          %s466 = scalar_lea.vmem [#allocation5], %s465
          %467 = dma.done %s463, 128
        $region44: #{tpu_custom_call.1} parent=39 // pred_fallthru
          _
      $region40: #{tpu_custom_call.1} parent=5 // pred_fallthru
        _
    $region6: #{tpu_custom_call.1} parent=1 // loop_footer
      %s24 = sadd.s32 1, %s20
    $region7: #{tpu_custom_call.1} parent=1 // loop_footer_branch
      %19 = sbr.rel target = $region3
    $region8: #{tpu_custom_call.1} parent=1 // loop_exit
      _
    %468 = vsyncpa [#allocation6], 1
    %s469 = scalar_lea.sflag [#allocation6], 1
    %470 = vsyncpa %s469, 1

</llo_original>
